<compile_context>
chip_gen: v6e
topology: v6e:2x2x1
jax: 0.10.0
libtpu: 0.0.40
codegen_flags: <defaults>
</compile_context>

<pallas_src>
import jax
import jax.numpy as jnp
from jax import lax
from jax.experimental import pallas as pl
from jax.experimental.pallas import tpu as pltpu


# Parameter-slab layout: layer i occupies lane columns [i*16, i*16 + K_i) for
# its weight matrix (stored (out_features, in_features), zero-padded to 8
# sublanes) and column i*16 + 8 for its bias column.
_LAYER_STRIDE = 16
_BIAS_COL = 8


def _round_up(x, m):
    return ((x + m - 1) // m) * m


def _make_kernel(d_in, hidden, d_out, chunk, n_chunks):
    k_dims = (d_in, hidden, hidden)        # contraction length of each layer

    def kernel(p_ref, x_ref, o_ref):
        p = p_ref[...]                     # (8, 128) packed parameter slab

        # Hoist every weight-column / bias lane-splat out of the chunk loop.
        # (JAX does not CSE broadcast_in_dim; re-materializing these per chunk
        #  per k-term would roughly 1.5x the vector work.)
        w_splat = []
        b_splat = []
        for layer in range(3):
            c0 = layer * _LAYER_STRIDE
            cb = c0 + _BIAS_COL
            b_splat.append(jnp.broadcast_to(p[:, cb:cb + 1], (8, chunk)))
            w_splat.append([jnp.broadcast_to(p[:, c0 + k:c0 + k + 1], (8, chunk))
                            for k in range(k_dims[layer])])

        def body(c, carry):
            off = pl.multiple_of(c * chunk, chunk)
            x = x_ref[:, pl.ds(off, chunk)]          # (d_in, chunk)

            # layer 0: acc[j,b] = b1[j] + sum_k W1[j,k] * x[k,b]
            acc = b_splat[0]
            for k in range(d_in):
                acc = acc + w_splat[0][k] * x[k:k + 1, :]
            h = jnp.maximum(acc, 0.0)

            # layer 1
            acc = b_splat[1]
            for k in range(hidden):
                acc = acc + w_splat[1][k] * h[k:k + 1, :]
            h = jnp.maximum(acc, 0.0)

            # layer 2 (no ReLU)
            acc = b_splat[2]
            for k in range(hidden):
                acc = acc + w_splat[2][k] * h[k:k + 1, :]

            # Lane-dense store; only d_out rows travel back to HBM.
            o_ref[:, pl.ds(off, chunk)] = acc[:d_out, :]
            return carry

        lax.fori_loop(0, n_chunks, body, 0,
                      unroll=2 if n_chunks % 2 == 0 else 1)

    return kernel


def pack_params(params):
    """Pack all weights/biases into one (8, 128) f32, (8,128)-aligned slab."""
    slab = jnp.zeros((8, 128), jnp.float32)
    layers = [(params["w1"], params["b1"]),
              (params["w2"], params["b2"]),
              (params["w3"], params["b3"])]
    for i, (w, b) in enumerate(layers):
        wt = jnp.asarray(w, jnp.float32).T          # (out_features, in_features)
        of, inf = wt.shape
        c0 = i * _LAYER_STRIDE
        slab = slab.at[:of, c0:c0 + inf].set(wt)
        slab = slab.at[:of, c0 + _BIAS_COL].set(jnp.asarray(b, jnp.float32).reshape(-1))
    return slab


def general_fit_forward(x, params, *, batch_tile=65536, chunk=256):
    """x: (B, input_size) float32.
    params: dict with transposed weights w* (in_features, out_features) and
    biases b* (1, out_features).  Returns (B, output_size) float32."""
    B, d_in = x.shape
    hidden = params["w1"].shape[1]
    d_out = params["w3"].shape[1]
    # Packed-slab / 8-sublane layout assumes tiny feature dims (as in the spec).
    assert max(d_in, hidden, d_out) <= 8, "feature dims must be <= 8"

    slab = pack_params(params)

    # --- tile sizing --------------------------------------------------------
    # Lane-dense batch tiles: large enough to amortize per-grid-step overhead,
    # capped so big batches still give >= ~8 grid steps (megacore + pipeline),
    # and a multiple of the inner chunk (itself a multiple of 128).
    b128 = _round_up(max(B, 1), 128)
    bt = min(batch_tile, max(128, _round_up((b128 + 7) // 8, 128)))
    if bt < chunk:
        chunk = bt                               # bt is already a multiple of 128
    else:
        bt = _round_up(bt, chunk)
    b_pad = _round_up(B, bt)
    n_chunks = bt // chunk

    # Batch-on-lanes layout, NO sublane padding: only d_in rows in, d_out out.
    xt = jnp.zeros((d_in, b_pad), jnp.float32).at[:, :B].set(x.T)

    yt = pl.pallas_call(
        _make_kernel(d_in, hidden, d_out, chunk, n_chunks),
        out_shape=jax.ShapeDtypeStruct((d_out, b_pad), jnp.float32),
        grid=(b_pad // bt,),
        in_specs=[
            pl.BlockSpec((8, 128), lambda i: (0, 0)),     # params: VMEM-resident
            pl.BlockSpec((d_in, bt), lambda i: (0, i)),   # activation tile
        ],
        out_specs=pl.BlockSpec((d_out, bt), lambda i: (0, i)),
        compiler_params=pltpu.CompilerParams(
            dimension_semantics=("parallel",)),           # shard tiles across TCs
    )(slab, xt)

    # Drop padding, put batch back on the leading axis.
    return yt[:, :B].T


def init_params(key, input_size, output_size, hidden_size=5):
    """Deterministic init mimicking torch.nn.Linear defaults:
    U(-1/sqrt(fan_in), 1/sqrt(fan_in)) for weight and bias.
    Weights stored transposed: (in_features, out_features)."""
    ks = jax.random.split(key, 6)

    def lin(kw, kb, fan_in, fan_out):
        bound = 1.0 / jnp.sqrt(float(fan_in))
        w = jax.random.uniform(kw, (fan_in, fan_out), jnp.float32,
                               minval=-bound, maxval=bound)
        b = jax.random.uniform(kb, (1, fan_out), jnp.float32,
                               minval=-bound, maxval=bound)
        return w, b

    w1, b1 = lin(ks[0], ks[1], input_size, hidden_size)
    w2, b2 = lin(ks[2], ks[3], hidden_size, hidden_size)
    w3, b3 = lin(ks[4], ks[5], hidden_size, output_size)
    return {"w1": w1, "b1": b1, "w2": w2, "b2": b2, "w3": w3, "b3": b3}


def reference_forward(x, p):
    h = jnp.maximum(x @ p["w1"] + p["b1"], 0.0)
    h = jnp.maximum(h @ p["w2"] + p["b2"], 0.0)
    return h @ p["w3"] + p["b3"]


if __name__ == "__main__":
    key = jax.random.PRNGKey(0)
    k_x, k_p = jax.random.split(key)

    batch, input_size, output_size, hidden_size = 8, 4, 3, 5

    x = jax.random.normal(k_x, (batch, input_size), dtype=jnp.float32)
    params = init_params(k_p, input_size, output_size, hidden_size)

    out = jax.block_until_ready(general_fit_forward(x, params))

    ref = reference_forward(x, params)
    assert out.shape == (batch, output_size)
    assert jnp.allclose(out, ref, atol=1e-5, rtol=1e-5), \
        float(jnp.max(jnp.abs(out - ref)))

    print("KERNEL_OK")
</pallas_src>

<mosaic_0001>
module attributes {stable_mosaic.version = 11 : i64} {
  func.func @kernel(%arg0: i32, %arg1: memref<8x128xf32, #tpu.memory_space<vmem>>, %arg2: memref<4x128xf32, #tpu.memory_space<vmem>>, %arg3: memref<3x128xf32, #tpu.memory_space<vmem>>) attributes {dimension_semantics = [#tpu.dimension_semantics<parallel>], iteration_bounds = array<i64: 1>, scalar_prefetch = 0 : i64, scratch_operands = 0 : i64, tpu.core_type = #tpu.core_type<tc>, window_params = [{pipeline_mode = #tpu.pipeline_mode<synchronous>, transform_indices = @transform_0, window_bounds = array<i64: 8, 128>}, {transform_indices = @transform_1, window_bounds = array<i64: 4, 128>}, {transform_indices = @transform_2, window_bounds = array<i64: 3, 128>}]} {
    %c0 = arith.constant 0 : index
    %c0_0 = arith.constant 0 : index
    %0 = vector.load %arg1[%c0, %c0_0] : memref<8x128xf32, #tpu.memory_space<vmem>>, vector<8x128xf32>
    %1 = vector.extract_strided_slice %0 {offsets = [0, 8], sizes = [8, 1], strides = [1, 1]} : vector<8x128xf32> to vector<8x1xf32>
    %2 = vector.shape_cast %1 : vector<8x1xf32> to vector<8x1xf32>
    %3 = vector.broadcast %2 : vector<8x1xf32> to vector<8x128xf32>
    %4 = vector.extract_strided_slice %0 {offsets = [0, 0], sizes = [8, 1], strides = [1, 1]} : vector<8x128xf32> to vector<8x1xf32>
    %5 = vector.shape_cast %4 : vector<8x1xf32> to vector<8x1xf32>
    %6 = vector.broadcast %5 : vector<8x1xf32> to vector<8x128xf32>
    %7 = vector.extract_strided_slice %0 {offsets = [0, 1], sizes = [8, 1], strides = [1, 1]} : vector<8x128xf32> to vector<8x1xf32>
    %8 = vector.shape_cast %7 : vector<8x1xf32> to vector<8x1xf32>
    %9 = vector.broadcast %8 : vector<8x1xf32> to vector<8x128xf32>
    %10 = vector.extract_strided_slice %0 {offsets = [0, 2], sizes = [8, 1], strides = [1, 1]} : vector<8x128xf32> to vector<8x1xf32>
    %11 = vector.shape_cast %10 : vector<8x1xf32> to vector<8x1xf32>
    %12 = vector.broadcast %11 : vector<8x1xf32> to vector<8x128xf32>
    %13 = vector.extract_strided_slice %0 {offsets = [0, 3], sizes = [8, 1], strides = [1, 1]} : vector<8x128xf32> to vector<8x1xf32>
    %14 = vector.shape_cast %13 : vector<8x1xf32> to vector<8x1xf32>
    %15 = vector.broadcast %14 : vector<8x1xf32> to vector<8x128xf32>
    %16 = vector.extract_strided_slice %0 {offsets = [0, 24], sizes = [8, 1], strides = [1, 1]} : vector<8x128xf32> to vector<8x1xf32>
    %17 = vector.shape_cast %16 : vector<8x1xf32> to vector<8x1xf32>
    %18 = vector.broadcast %17 : vector<8x1xf32> to vector<8x128xf32>
    %19 = vector.extract_strided_slice %0 {offsets = [0, 16], sizes = [8, 1], strides = [1, 1]} : vector<8x128xf32> to vector<8x1xf32>
    %20 = vector.shape_cast %19 : vector<8x1xf32> to vector<8x1xf32>
    %21 = vector.broadcast %20 : vector<8x1xf32> to vector<8x128xf32>
    %22 = vector.extract_strided_slice %0 {offsets = [0, 17], sizes = [8, 1], strides = [1, 1]} : vector<8x128xf32> to vector<8x1xf32>
    %23 = vector.shape_cast %22 : vector<8x1xf32> to vector<8x1xf32>
    %24 = vector.broadcast %23 : vector<8x1xf32> to vector<8x128xf32>
    %25 = vector.extract_strided_slice %0 {offsets = [0, 18], sizes = [8, 1], strides = [1, 1]} : vector<8x128xf32> to vector<8x1xf32>
    %26 = vector.shape_cast %25 : vector<8x1xf32> to vector<8x1xf32>
    %27 = vector.broadcast %26 : vector<8x1xf32> to vector<8x128xf32>
    %28 = vector.extract_strided_slice %0 {offsets = [0, 19], sizes = [8, 1], strides = [1, 1]} : vector<8x128xf32> to vector<8x1xf32>
    %29 = vector.shape_cast %28 : vector<8x1xf32> to vector<8x1xf32>
    %30 = vector.broadcast %29 : vector<8x1xf32> to vector<8x128xf32>
    %31 = vector.extract_strided_slice %0 {offsets = [0, 20], sizes = [8, 1], strides = [1, 1]} : vector<8x128xf32> to vector<8x1xf32>
    %32 = vector.shape_cast %31 : vector<8x1xf32> to vector<8x1xf32>
    %33 = vector.broadcast %32 : vector<8x1xf32> to vector<8x128xf32>
    %34 = vector.extract_strided_slice %0 {offsets = [0, 40], sizes = [8, 1], strides = [1, 1]} : vector<8x128xf32> to vector<8x1xf32>
    %35 = vector.shape_cast %34 : vector<8x1xf32> to vector<8x1xf32>
    %36 = vector.broadcast %35 : vector<8x1xf32> to vector<8x128xf32>
    %37 = vector.extract_strided_slice %0 {offsets = [0, 32], sizes = [8, 1], strides = [1, 1]} : vector<8x128xf32> to vector<8x1xf32>
    %38 = vector.shape_cast %37 : vector<8x1xf32> to vector<8x1xf32>
    %39 = vector.broadcast %38 : vector<8x1xf32> to vector<8x128xf32>
    %40 = vector.extract_strided_slice %0 {offsets = [0, 33], sizes = [8, 1], strides = [1, 1]} : vector<8x128xf32> to vector<8x1xf32>
    %41 = vector.shape_cast %40 : vector<8x1xf32> to vector<8x1xf32>
    %42 = vector.broadcast %41 : vector<8x1xf32> to vector<8x128xf32>
    %43 = vector.extract_strided_slice %0 {offsets = [0, 34], sizes = [8, 1], strides = [1, 1]} : vector<8x128xf32> to vector<8x1xf32>
    %44 = vector.shape_cast %43 : vector<8x1xf32> to vector<8x1xf32>
    %45 = vector.broadcast %44 : vector<8x1xf32> to vector<8x128xf32>
    %46 = vector.extract_strided_slice %0 {offsets = [0, 35], sizes = [8, 1], strides = [1, 1]} : vector<8x128xf32> to vector<8x1xf32>
    %47 = vector.shape_cast %46 : vector<8x1xf32> to vector<8x1xf32>
    %48 = vector.broadcast %47 : vector<8x1xf32> to vector<8x128xf32>
    %49 = vector.extract_strided_slice %0 {offsets = [0, 36], sizes = [8, 1], strides = [1, 1]} : vector<8x128xf32> to vector<8x1xf32>
    %50 = vector.shape_cast %49 : vector<8x1xf32> to vector<8x1xf32>
    %51 = vector.broadcast %50 : vector<8x1xf32> to vector<8x128xf32>
    %c0_i32 = arith.constant 0 : i32
    %c128_i32 = arith.constant 128 : i32
    %52 = arith.muli %c0_i32, %c128_i32 : i32
    %53 = tpu.assume_multiple %52, 128 : i32
    %c0_1 = arith.constant 0 : index
    %54 = arith.index_cast %53 : i32 to index
    %55 = vector.load %arg2[%c0_1, %54] : memref<4x128xf32, #tpu.memory_space<vmem>>, vector<4x128xf32>
    %56 = vector.extract_strided_slice %55 {offsets = [0, 0], sizes = [1, 128], strides = [1, 1]} : vector<4x128xf32> to vector<1x128xf32>
    %57 = vector.broadcast %56 : vector<1x128xf32> to vector<8x128xf32>
    %58 = arith.mulf %6, %57 : vector<8x128xf32>
    %59 = arith.addf %3, %58 : vector<8x128xf32>
    %60 = vector.extract_strided_slice %55 {offsets = [1, 0], sizes = [1, 128], strides = [1, 1]} : vector<4x128xf32> to vector<1x128xf32>
    %61 = vector.broadcast %60 : vector<1x128xf32> to vector<8x128xf32>
    %62 = arith.mulf %9, %61 : vector<8x128xf32>
    %63 = arith.addf %59, %62 : vector<8x128xf32>
    %64 = vector.extract_strided_slice %55 {offsets = [2, 0], sizes = [1, 128], strides = [1, 1]} : vector<4x128xf32> to vector<1x128xf32>
    %65 = vector.broadcast %64 : vector<1x128xf32> to vector<8x128xf32>
    %66 = arith.mulf %12, %65 : vector<8x128xf32>
    %67 = arith.addf %63, %66 : vector<8x128xf32>
    %68 = vector.extract_strided_slice %55 {offsets = [3, 0], sizes = [1, 128], strides = [1, 1]} : vector<4x128xf32> to vector<1x128xf32>
    %69 = vector.broadcast %68 : vector<1x128xf32> to vector<8x128xf32>
    %70 = arith.mulf %15, %69 : vector<8x128xf32>
    %71 = arith.addf %67, %70 : vector<8x128xf32>
    %cst = arith.constant 0.000000e+00 : f32
    %72 = vector.broadcast %cst : f32 to vector<8x128xf32>
    %73 = arith.maximumf %71, %72 : vector<8x128xf32>
    %74 = vector.extract_strided_slice %73 {offsets = [0, 0], sizes = [1, 128], strides = [1, 1]} : vector<8x128xf32> to vector<1x128xf32>
    %75 = vector.broadcast %74 : vector<1x128xf32> to vector<8x128xf32>
    %76 = arith.mulf %21, %75 : vector<8x128xf32>
    %77 = arith.addf %18, %76 : vector<8x128xf32>
    %78 = vector.extract_strided_slice %73 {offsets = [1, 0], sizes = [1, 128], strides = [1, 1]} : vector<8x128xf32> to vector<1x128xf32>
    %79 = vector.broadcast %78 : vector<1x128xf32> to vector<8x128xf32>
    %80 = arith.mulf %24, %79 : vector<8x128xf32>
    %81 = arith.addf %77, %80 : vector<8x128xf32>
    %82 = vector.extract_strided_slice %73 {offsets = [2, 0], sizes = [1, 128], strides = [1, 1]} : vector<8x128xf32> to vector<1x128xf32>
    %83 = vector.broadcast %82 : vector<1x128xf32> to vector<8x128xf32>
    %84 = arith.mulf %27, %83 : vector<8x128xf32>
    %85 = arith.addf %81, %84 : vector<8x128xf32>
    %86 = vector.extract_strided_slice %73 {offsets = [3, 0], sizes = [1, 128], strides = [1, 1]} : vector<8x128xf32> to vector<1x128xf32>
    %87 = vector.broadcast %86 : vector<1x128xf32> to vector<8x128xf32>
    %88 = arith.mulf %30, %87 : vector<8x128xf32>
    %89 = arith.addf %85, %88 : vector<8x128xf32>
    %90 = vector.extract_strided_slice %73 {offsets = [4, 0], sizes = [1, 128], strides = [1, 1]} : vector<8x128xf32> to vector<1x128xf32>
    %91 = vector.broadcast %90 : vector<1x128xf32> to vector<8x128xf32>
    %92 = arith.mulf %33, %91 : vector<8x128xf32>
    %93 = arith.addf %89, %92 : vector<8x128xf32>
    %cst_2 = arith.constant 0.000000e+00 : f32
    %94 = vector.broadcast %cst_2 : f32 to vector<8x128xf32>
    %95 = arith.maximumf %93, %94 : vector<8x128xf32>
    %96 = vector.extract_strided_slice %95 {offsets = [0, 0], sizes = [1, 128], strides = [1, 1]} : vector<8x128xf32> to vector<1x128xf32>
    %97 = vector.broadcast %96 : vector<1x128xf32> to vector<8x128xf32>
    %98 = arith.mulf %39, %97 : vector<8x128xf32>
    %99 = arith.addf %36, %98 : vector<8x128xf32>
    %100 = vector.extract_strided_slice %95 {offsets = [1, 0], sizes = [1, 128], strides = [1, 1]} : vector<8x128xf32> to vector<1x128xf32>
    %101 = vector.broadcast %100 : vector<1x128xf32> to vector<8x128xf32>
    %102 = arith.mulf %42, %101 : vector<8x128xf32>
    %103 = arith.addf %99, %102 : vector<8x128xf32>
    %104 = vector.extract_strided_slice %95 {offsets = [2, 0], sizes = [1, 128], strides = [1, 1]} : vector<8x128xf32> to vector<1x128xf32>
    %105 = vector.broadcast %104 : vector<1x128xf32> to vector<8x128xf32>
    %106 = arith.mulf %45, %105 : vector<8x128xf32>
    %107 = arith.addf %103, %106 : vector<8x128xf32>
    %108 = vector.extract_strided_slice %95 {offsets = [3, 0], sizes = [1, 128], strides = [1, 1]} : vector<8x128xf32> to vector<1x128xf32>
    %109 = vector.broadcast %108 : vector<1x128xf32> to vector<8x128xf32>
    %110 = arith.mulf %48, %109 : vector<8x128xf32>
    %111 = arith.addf %107, %110 : vector<8x128xf32>
    %112 = vector.extract_strided_slice %95 {offsets = [4, 0], sizes = [1, 128], strides = [1, 1]} : vector<8x128xf32> to vector<1x128xf32>
    %113 = vector.broadcast %112 : vector<1x128xf32> to vector<8x128xf32>
    %114 = arith.mulf %51, %113 : vector<8x128xf32>
    %115 = arith.addf %111, %114 : vector<8x128xf32>
    %116 = vector.extract_strided_slice %115 {offsets = [0, 0], sizes = [3, 128], strides = [1, 1]} : vector<8x128xf32> to vector<3x128xf32>
    %c0_3 = arith.constant 0 : index
    %117 = arith.index_cast %53 : i32 to index
    %118 = vector.load %arg3[%c0_3, %117] : memref<3x128xf32, #tpu.memory_space<vmem>>, vector<3x128xf32>
    tpu.vector_store %arg3[%c0_3, %117], %116 {strides = array<i32>} : memref<3x128xf32, #tpu.memory_space<vmem>>, vector<3x128xf32>,
    %c1_i32 = arith.constant 1 : i32
    return
  }
  func.func @transform_0(%arg0: i32) -> (i32, i32) {
    %c0_i32 = arith.constant 0 : i32
    %c0_i32_0 = arith.constant 0 : i32
    %c0_i32_1 = arith.constant 0 : i32
    return %c0_i32, %c0_i32_0 : i32, i32
  }
  func.func @transform_1(%arg0: i32) -> (i32, i32) {
    %c0_i32 = arith.constant 0 : i32
    %c0_i32_0 = arith.constant 0 : i32
    return %c0_i32, %arg0 : i32, i32
  }
  func.func @transform_2(%arg0: i32) -> (i32, i32) {
    %c0_i32 = arith.constant 0 : i32
    %c0_i32_0 = arith.constant 0 : i32
    return %c0_i32, %arg0 : i32, i32
  }
}

</mosaic_0001>

<llo_original>
// kernel: tpu_custom_call.1
$region0: #{tpu_custom_call.1}
  #allocation0 [shape = 'u32[]', space=smem, size = 0x4, offset = 0x4, fixed_abs, tag = 'smem constant byte address 0x4 - core index']
  #allocation1 [shape = 'u32[144,128]{1,0:T(1,128)}', space=vmem, size = 0x12000, scoped, tag = 'internal scratch']
  %s0 = inlined_call_operand.hbm [shape: f32[8,128], index: 0, kind: input, shape index: {}]
  %s1 = inlined_call_operand.hbm [shape: f32[4,128], index: 1, kind: input, shape index: {}]
  %s2 = inlined_call_operand.hbm [shape: f32[3,128], index: 2, kind: output, shape index: {}]
  %s3 = sld [smem:[#allocation0]]
  $region26: #{tpu_custom_call.1} parent=0
    _
  %s5 = ssub.s32 1, %s3
  %s6 = scalar_select 0, %s5, %s3
  $region1: #{tpu_custom_call.1} parent=0
    #allocation2 [shape = 'u8[4096]{0}', space=vmem, size = 0x1000, scoped, tag = 'input window, operand 0, single buffered']
    #allocation3 [shape = 's32[1]{0}', space=sflag, size = 0x4, scoped, tag = 'scoped memory for tpu_custom_call.1']
    #allocation4 [shape = 's32[1]{0}', space=sflag, size = 0x4, scoped, tag = 'scoped memory for tpu_custom_call.1']
    #allocation5 [shape = 'u8[2048]{0}', space=vmem, size = 0x800, scoped, tag = 'input window, operand 1, single buffered']
    #allocation6 [shape = 's32[1]{0}', space=sflag, size = 0x4, scoped, tag = 'scoped memory for tpu_custom_call.1']
    #allocation7 [shape = 'u8[2048]{0}', space=vmem, size = 0x800, scoped, tag = 'output window, operand 0, single buffered']
    %7 = vsyncpa [#allocation3], 0
    %8 = vsyncpa [#allocation6], 0
    %9 = vsyncpa [#allocation4], 0
    // Predicated region
    $region2: #{tpu_custom_call.1} parent=1 // pred_check
      _
    $region3: #{tpu_custom_call.1} parent=1 // pred_check_branch
      %11 = sbr.rel (0) target = $region5
    $region4: #{tpu_custom_call.1} parent=1 // pred_region
      %s13 = ssub.s32 128, 128
      %14 = vsyncadd [#allocation3], %s13
      %s16 = sshll.u32 [#allocation2], 4
      %s17 = int_to_ptr.vmem [resolvable:$true] %s16
      %19 = dma.hbm_to_vmem [thread:$0]  %s0, 128, %s17, [#allocation3]
    $region5: #{tpu_custom_call.1} parent=1 // pred_fallthru
      _
    // Predicated region
    $region6: #{tpu_custom_call.1} parent=1 // pred_check
      _
    $region7: #{tpu_custom_call.1} parent=1 // pred_check_branch
      %21 = sbr.rel (0) target = $region9
    $region8: #{tpu_custom_call.1} parent=1 // pred_region
      %s23 = ssub.s32 64, 64
      %24 = vsyncadd [#allocation6], %s23
      %s26 = sshll.u32 [#allocation5], 4
      %s27 = int_to_ptr.vmem [resolvable:$true] %s26
      %29 = dma.hbm_to_vmem [thread:$0]  %s1, 64, %s27, [#allocation6]
    $region9: #{tpu_custom_call.1} parent=1 // pred_fallthru
      _
    // Predicated region
    $region10: #{tpu_custom_call.1} parent=1 // pred_check
      _
    $region11: #{tpu_custom_call.1} parent=1 // pred_check_branch
      %31 = sbr.rel (0) target = $region13
    $region12: #{tpu_custom_call.1} parent=1 // pred_region
      %32 = dma.done [#allocation3], 128
    $region13: #{tpu_custom_call.1} parent=1 // pred_fallthru
      _
    // Predicated region
    $region14: #{tpu_custom_call.1} parent=1 // pred_check
      _
    $region15: #{tpu_custom_call.1} parent=1 // pred_check_branch
      %34 = sbr.rel (0) target = $region17
    $region16: #{tpu_custom_call.1} parent=1 // pred_region
      %35 = dma.done [#allocation6], 64
    $region17: #{tpu_custom_call.1} parent=1 // pred_fallthru
      _
    %v36 = vld [vmem:[#allocation2] sm:$0xff]
    %38 = vset.pattern.permute.xlu0 8
    %39 = vperm.xlu0 %38, %v36
    %v40 = vpop.permute.xlu0 %39
    %42 = vset.pattern.permute.xlu0 0
    %43 = vperm.xlu0 %42, %v36
    %v44 = vpop.permute.xlu0 %43
    %46 = vset.pattern.permute.xlu0 1
    %47 = vperm.xlu0 %46, %v36
    %v48 = vpop.permute.xlu0 %47
    %50 = vset.pattern.permute.xlu0 2
    %51 = vperm.xlu0 %50, %v36
    %v52 = vpop.permute.xlu0 %51
    %54 = vset.pattern.permute.xlu0 3
    %55 = vperm.xlu0 %54, %v36
    %v56 = vpop.permute.xlu0 %55
    %58 = vset.pattern.permute.xlu0 24
    %59 = vperm.xlu0 %58, %v36
    %v60 = vpop.permute.xlu0 %59
    %62 = vset.pattern.permute.xlu0 16
    %63 = vperm.xlu0 %62, %v36
    %v64 = vpop.permute.xlu0 %63
    %66 = vset.pattern.permute.xlu0 17
    %67 = vperm.xlu0 %66, %v36
    %v68 = vpop.permute.xlu0 %67
    %70 = vset.pattern.permute.xlu0 18
    %71 = vperm.xlu0 %70, %v36
    %v72 = vpop.permute.xlu0 %71
    %74 = vset.pattern.permute.xlu0 19
    %75 = vperm.xlu0 %74, %v36
    %v76 = vpop.permute.xlu0 %75
    %78 = vset.pattern.permute.xlu0 20
    %79 = vperm.xlu0 %78, %v36
    %v80 = vpop.permute.xlu0 %79
    %82 = vset.pattern.permute.xlu0 40
    %83 = vperm.xlu0 %82, %v36
    %v84 = vpop.permute.xlu0 %83
    %86 = vset.pattern.permute.xlu0 32
    %87 = vperm.xlu0 %86, %v36
    %v88 = vpop.permute.xlu0 %87
    %90 = vset.pattern.permute.xlu0 33
    %91 = vperm.xlu0 %90, %v36
    %v92 = vpop.permute.xlu0 %91
    %94 = vset.pattern.permute.xlu0 34
    %95 = vperm.xlu0 %94, %v36
    %v96 = vpop.permute.xlu0 %95
    %98 = vset.pattern.permute.xlu0 35
    %99 = vperm.xlu0 %98, %v36
    %v100 = vpop.permute.xlu0 %99
    %102 = vset.pattern.permute.xlu0 36
    %103 = vperm.xlu0 %102, %v36
    %v104 = vpop.permute.xlu0 %103
    %v106 = vld [vmem:[#allocation5] sm:$0xf]
    %v107 = vlaneseq
    %v108 = vshrl.u32 %v107, 7
    %v109 = vsub.s32 0, %v108
    %v110 = vrot.slane %v106, %v109
    %v111 = vmul.f32 %v44, %v110
    %v112 = vadd.f32 %v40, %v111
    %v113 = vlaneseq
    %v114 = vshrl.u32 %v113, 7
    %v115 = vsub.s32 1, %v114
    %v116 = vrot.slane %v106, %v115
    %v117 = vmul.f32 %v48, %v116
    %v118 = vadd.f32 %v112, %v117
    %v119 = vlaneseq
    %v120 = vshrl.u32 %v119, 7
    %v121 = vsub.s32 2, %v120
    %v122 = vrot.slane %v106, %v121
    %v123 = vmul.f32 %v52, %v122
    %v124 = vadd.f32 %v118, %v123
    %v125 = vlaneseq
    %v126 = vshrl.u32 %v125, 7
    %v127 = vsub.s32 3, %v126
    %v128 = vrot.slane %v106, %v127
    %v129 = vmul.f32 %v56, %v128
    %v130 = vadd.f32 %v124, %v129
    %v131 = vmax.f32 %v130, 0.0
    %v132 = vlaneseq
    %v133 = vshrl.u32 %v132, 7
    %v134 = vsub.s32 0, %v133
    %v135 = vrot.slane %v131, %v134
    %v136 = vmul.f32 %v64, %v135
    %v137 = vadd.f32 %v60, %v136
    %v138 = vlaneseq
    %v139 = vshrl.u32 %v138, 7
    %v140 = vsub.s32 1, %v139
    %v141 = vrot.slane %v131, %v140
    %v142 = vmul.f32 %v68, %v141
    %v143 = vadd.f32 %v137, %v142
    %v144 = vlaneseq
    %v145 = vshrl.u32 %v144, 7
    %v146 = vsub.s32 2, %v145
    %v147 = vrot.slane %v131, %v146
    %v148 = vmul.f32 %v72, %v147
    %v149 = vadd.f32 %v143, %v148
    %v150 = vlaneseq
    %v151 = vshrl.u32 %v150, 7
    %v152 = vsub.s32 3, %v151
    %v153 = vrot.slane %v131, %v152
    %v154 = vmul.f32 %v76, %v153
    %v155 = vadd.f32 %v149, %v154
    %v156 = vlaneseq
    %v157 = vshrl.u32 %v156, 7
    %v158 = vsub.s32 4, %v157
    %v159 = vrot.slane %v131, %v158
    %v160 = vmul.f32 %v80, %v159
    %v161 = vadd.f32 %v155, %v160
    %v162 = vmax.f32 %v161, 0.0
    %v163 = vlaneseq
    %v164 = vshrl.u32 %v163, 7
    %v165 = vsub.s32 0, %v164
    %v166 = vrot.slane %v162, %v165
    %v167 = vmul.f32 %v88, %v166
    %v168 = vadd.f32 %v84, %v167
    %v169 = vlaneseq
    %v170 = vshrl.u32 %v169, 7
    %v171 = vsub.s32 1, %v170
    %v172 = vrot.slane %v162, %v171
    %v173 = vmul.f32 %v92, %v172
    %v174 = vadd.f32 %v168, %v173
    %v175 = vlaneseq
    %v176 = vshrl.u32 %v175, 7
    %v177 = vsub.s32 2, %v176
    %v178 = vrot.slane %v162, %v177
    %v179 = vmul.f32 %v96, %v178
    %v180 = vadd.f32 %v174, %v179
    %v181 = vlaneseq
    %v182 = vshrl.u32 %v181, 7
    %v183 = vsub.s32 3, %v182
    %v184 = vrot.slane %v162, %v183
    %v185 = vmul.f32 %v100, %v184
    %v186 = vadd.f32 %v180, %v185
    %v187 = vlaneseq
    %v188 = vshrl.u32 %v187, 7
    %v189 = vsub.s32 4, %v188
    %v190 = vrot.slane %v162, %v189
    %v191 = vmul.f32 %v104, %v190
    %v192 = vadd.f32 %v186, %v191
    %193 = vst [vmem:[#allocation7] sm:$0x7] %v192
    // Predicated region
    $region18: #{tpu_custom_call.1} parent=1 // pred_check
      _
    $region19: #{tpu_custom_call.1} parent=1 // pred_check_branch
      %195 = sbr.rel (0) target = $region21
    $region20: #{tpu_custom_call.1} parent=1 // pred_region
      %s197 = ssub.s32 64, 64
      %198 = vsyncadd [#allocation4], %s197
      %s200 = sshll.u32 [#allocation7], 4
      %s201 = int_to_ptr.vmem [resolvable:$true] %s200
      %203 = dma.vmem_to_hbm [thread:$0]  %s201, 64, %s2, [#allocation4]
    $region21: #{tpu_custom_call.1} parent=1 // pred_fallthru
      _
    // Predicated region
    $region22: #{tpu_custom_call.1} parent=1 // pred_check
      _
    $region23: #{tpu_custom_call.1} parent=1 // pred_check_branch
      %205 = sbr.rel (0) target = $region25
    $region24: #{tpu_custom_call.1} parent=1 // pred_region
      %206 = dma.done [#allocation4], 64
    $region25: #{tpu_custom_call.1} parent=1 // pred_fallthru
      _
    %207 = vsyncpa [#allocation3], 1
    %208 = vsyncpa [#allocation6], 1
    %209 = vsyncpa [#allocation4], 1

</llo_original>
